<compile_context>
chip_gen: v7x
topology: tpu7x:2x2x1
jax: 0.10.0
libtpu: 0.0.40
codegen_flags: <defaults>
</compile_context>

<pallas_src>
from itertools import combinations

import numpy as np
import jax
import jax.numpy as jnp
from jax.experimental import pallas as pl
from jax.experimental.pallas import tpu as pltpu


LANES = 128
SUBLANES = 8


def _round_up(x: int, m: int) -> int:
    return ((x + m - 1) // m) * m


# ----------------------------------------------------------------------------
# Glue: "AllTripletSelector" — all (anchor, positive, negative) index triplets.
# ----------------------------------------------------------------------------
def all_triplets(labels_np: np.ndarray) -> np.ndarray:
    triplets = []
    for label in sorted(set(labels_np.tolist())):
        mask = labels_np == label
        label_idx = np.where(mask)[0]
        if len(label_idx) < 2:
            continue
        neg_idx = np.where(~mask)[0]
        for a, p in combinations(label_idx, 2):
            for n in neg_idx:
                triplets.append([a, p, n])
    if not triplets:
        return np.zeros((0, 3), dtype=np.int32)
    return np.asarray(triplets, dtype=np.int32)


# ----------------------------------------------------------------------------
# Kernel 1: pairwise squared-distance matrix via the MXU.
#   grid = (k_tiles,) — reduction over the padded feature dimension.
#   x_ref:   (N_pad, TILE_K) block of the zero-padded embeddings
#   out_ref: (N_pad, N_pad)  resident f32 block; used as the Gram accumulator
#            during the reduction, rewritten with distances at finalize.
# ----------------------------------------------------------------------------
def make_pdist_kernel(k_tiles: int):
    def kernel(x_ref, out_ref):
        k = pl.program_id(0)

        @pl.when(k == 0)
        def _():
            out_ref[...] = jnp.zeros_like(out_ref)

        xk = x_ref[...]
        # G += X_k @ X_k^T  (contract the lane/feature dim of both operands).
        out_ref[...] += jax.lax.dot_general(
            xk, xk, (((1,), (1,)), ((), ())),
            preferred_element_type=jnp.float32)

        @pl.when(k == k_tiles - 1)
        def _():
            g = out_ref[...]
            ri = jax.lax.broadcasted_iota(jnp.int32, g.shape, 0)
            ci = jax.lax.broadcasted_iota(jnp.int32, g.shape, 1)
            diag = jnp.where(ri == ci, g, 0.0)
            sq_i = jnp.sum(diag, axis=1, keepdims=True)   # (N_pad, 1) ||x_i||^2
            sq_j = jnp.sum(diag, axis=0, keepdims=True)   # (1, N_pad) ||x_j||^2
            out_ref[...] = sq_i + sq_j - 2.0 * g

    return kernel


def pairwise_sq_dists(x: jax.Array) -> jax.Array:
    """(N, D) embeddings -> (N_pad, N_pad) squared-L2 distance matrix."""
    n, d = x.shape
    n_pad = _round_up(max(n, 1), LANES)          # lane-dense output tiles
    tile_k = 512
    d_pad = _round_up(max(d, 1), LANES)
    if d_pad > tile_k:
        d_pad = _round_up(d_pad, tile_k)
    else:
        tile_k = d_pad
    k_tiles = d_pad // tile_k

    x_pad = jnp.zeros((n_pad, d_pad), x.dtype).at[:n, :d].set(x)

    itemsize = jnp.dtype(x.dtype).itemsize
    vmem_bytes = (2 * n_pad * tile_k * itemsize      # double-buffered input
                  + 2 * n_pad * n_pad * 4            # resident f32 output
                  + (2 << 20))                       # slack

    return pl.pallas_call(
        make_pdist_kernel(k_tiles),
        out_shape=jax.ShapeDtypeStruct((n_pad, n_pad), jnp.float32),
        grid_spec=pltpu.PrefetchScalarGridSpec(
            num_scalar_prefetch=0,
            grid=(k_tiles,),
            in_specs=[pl.BlockSpec((n_pad, tile_k), lambda k: (0, k))],
            out_specs=pl.BlockSpec((n_pad, n_pad), lambda k: (0, 0)),
        ),
        compiler_params=pltpu.CompilerParams(
            dimension_semantics=("arbitrary",),
            vmem_limit_bytes=int(vmem_bytes),
        ),
    )(x_pad)


# ----------------------------------------------------------------------------
# Kernel 2: hinge + mean over triplets, tiled along the (lane-dense) T axis.
#   grid = (r_tiles,)
#   d_ref:   (TILE_R, 128) block of delta = ap_dist - an_dist (padded)
#   out_ref: (1, 1) final mean loss
#   acc_ref: (1, 1) f32 running sum (resident across the grid)
# ----------------------------------------------------------------------------
def make_hinge_mean_kernel(margin: float, inv_t: float, r_tiles: int):
    def kernel(d_ref, out_ref, acc_ref):
        i = pl.program_id(0)

        @pl.when(i == 0)
        def _():
            acc_ref[...] = jnp.zeros_like(acc_ref)

        d = d_ref[...]                                    # (TILE_R, 128)
        hinge = jnp.maximum(d + margin, 0.0)              # F.relu
        row_sum = jnp.sum(hinge, axis=1, keepdims=True)   # lane reduce
        acc_ref[...] += jnp.sum(row_sum, axis=0, keepdims=True)

        @pl.when(i == r_tiles - 1)
        def _():
            out_ref[...] = acc_ref[...] * inv_t

    return kernel


def hinge_mean(delta: jax.Array, margin: float, num_triplets: int) -> jax.Array:
    t = num_triplets
    rows = -(-t // LANES)                           # ceil(T / 128)
    tile_r = min(_round_up(rows, SUBLANES), 512)
    rows_pad = _round_up(rows, tile_r)
    r_tiles = rows_pad // tile_r

    # Pad with a value whose hinge contribution is exactly zero.
    fill = -(float(margin) + 1.0)
    pad_len = rows_pad * LANES - t
    delta_p = jnp.pad(delta.astype(jnp.float32), (0, pad_len),
                      constant_values=fill)
    delta2d = delta_p.reshape(rows_pad, LANES)

    vmem_bytes = 2 * tile_r * LANES * 4 + (2 << 20)

    out = pl.pallas_call(
        make_hinge_mean_kernel(float(margin), 1.0 / float(t), r_tiles),
        out_shape=jax.ShapeDtypeStruct((1, 1), jnp.float32),
        grid_spec=pltpu.PrefetchScalarGridSpec(
            num_scalar_prefetch=0,
            grid=(r_tiles,),
            in_specs=[pl.BlockSpec((tile_r, LANES), lambda i: (i, 0))],
            out_specs=pl.BlockSpec((1, 1), lambda i: (0, 0)),
            scratch_shapes=[pltpu.VMEM((1, 1), jnp.float32)],
        ),
        compiler_params=pltpu.CompilerParams(
            dimension_semantics=("arbitrary",),
            vmem_limit_bytes=int(vmem_bytes),
        ),
    )(delta2d)
    return out[0, 0]


# ----------------------------------------------------------------------------
# Wrapper: reproduces OnlineTripletLoss.forward semantics.
# Returns (mean_loss, num_triplets).
# ----------------------------------------------------------------------------
def online_triplet_loss(embeddings: jax.Array, labels, margin: float = 1.0):
    labels_np = np.asarray(labels)
    triplets = all_triplets(labels_np)                 # (T, 3) int32, host glue
    t = int(triplets.shape[0])
    if t == 0:
        # PyTorch: mean of an empty tensor is NaN (and len(triplets) == 0).
        return jnp.float32(jnp.nan), 0

    dist = pairwise_sq_dists(embeddings)               # (N_pad, N_pad) f32
    n_pad = dist.shape[0]
    flat = dist.reshape(-1)

    # Host-side flat-index arithmetic (triplets and n_pad are static), then a
    # cheap O(T)-element XLA gather from the small resident distance matrix.
    a = triplets[:, 0].astype(np.int64)
    ap_idx = (a * n_pad + triplets[:, 1]).astype(np.int32)
    an_idx = (a * n_pad + triplets[:, 2]).astype(np.int32)
    ap = jnp.take(flat, jnp.asarray(ap_idx))
    an = jnp.take(flat, jnp.asarray(an_idx))
    delta = ap - an                                    # (T,) f32

    loss = hinge_mean(delta, margin, t)
    return loss, t


if __name__ == "__main__":
    key = jax.random.PRNGKey(0)
    N, D = 8, 32
    margin = 1.0

    embeddings = jax.random.normal(key, (N, D), dtype=jnp.float32)
    labels = np.array([0, 0, 0, 0, 1, 1, 1, 1], dtype=np.int64)

    loss, n_triplets = online_triplet_loss(embeddings, labels, margin=margin)
    loss = jax.block_until_ready(loss)

    # Silent correctness check against a pure-JAX reference that mirrors the
    # PyTorch forward exactly (direct differences, no Gram-matrix trick).
    trips = jnp.asarray(all_triplets(labels))
    a = embeddings[trips[:, 0]]
    p = embeddings[trips[:, 1]]
    n = embeddings[trips[:, 2]]
    ap_ref = jnp.sum((a - p) ** 2, axis=1)
    an_ref = jnp.sum((a - n) ** 2, axis=1)
    ref = jax.block_until_ready(jnp.mean(jax.nn.relu(ap_ref - an_ref + margin)))

    np.testing.assert_allclose(np.asarray(loss), np.asarray(ref),
                               rtol=5e-4, atol=5e-4)
    assert n_triplets == int(trips.shape[0])

    print("KERNEL_OK")
</pallas_src>

<mosaic_0001>
module attributes {stable_mosaic.version = 11 : i64} {
  func.func @kernel(%arg0: i32, %arg1: memref<128x128xf32, #tpu.memory_space<vmem>>, %arg2: memref<128x128xf32, #tpu.memory_space<vmem>>) attributes {dimension_semantics = [#tpu.dimension_semantics<arbitrary>], iteration_bounds = array<i64: 1>, scalar_prefetch = 0 : i64, scratch_operands = 0 : i64, tpu.core_type = #tpu.core_type<tc>, window_params = [{transform_indices = @transform_0, window_bounds = array<i64: 128, 128>}, {pipeline_mode = #tpu.pipeline_mode<synchronous>, transform_indices = @transform_1, window_bounds = array<i64: 128, 128>}]} {
    %c0_i32 = arith.constant 0 : i32
    %0 = arith.cmpi eq, %arg0, %c0_i32 : i32
    %1 = arith.extui %0 : i1 to i32
    %c0_i32_0 = arith.constant 0 : i32
    %2 = arith.cmpi ne, %1, %c0_i32_0 : i32
    scf.if %2 {
      %cst_8 = arith.constant 0.000000e+00 : f32
      %11 = vector.broadcast %cst_8 : f32 to vector<128x128xf32>
      %c0_9 = arith.constant 0 : index
      %c0_10 = arith.constant 0 : index
      %12 = vector.load %arg2[%c0_9, %c0_10] : memref<128x128xf32, #tpu.memory_space<vmem>>, vector<128x128xf32>
      tpu.vector_store %arg2[%c0_9, %c0_10], %11 {strides = array<i32>} : memref<128x128xf32, #tpu.memory_space<vmem>>, vector<128x128xf32>,
    } else {
    }
    %c0 = arith.constant 0 : index
    %c0_1 = arith.constant 0 : index
    %3 = vector.load %arg1[%c0, %c0_1] : memref<128x128xf32, #tpu.memory_space<vmem>>, vector<128x128xf32>
    %c0_2 = arith.constant 0 : index
    %c0_3 = arith.constant 0 : index
    %4 = vector.load %arg2[%c0_2, %c0_3] : memref<128x128xf32, #tpu.memory_space<vmem>>, vector<128x128xf32>
    %cst = arith.constant dense<0.000000e+00> : vector<128x128xf32>
    %5 = tpu.matmul %3, %3, %cst {dimension_numbers = #tpu.dot_dimension_numbers<[1], [1], [0], [0], [0, 0, 1, 0], [], []>} : vector<128x128xf32>, vector<128x128xf32>, vector<128x128xf32> -> vector<128x128xf32>
    %6 = arith.addf %4, %5 : vector<128x128xf32>
    %c0_4 = arith.constant 0 : index
    %c0_5 = arith.constant 0 : index
    %7 = vector.load %arg2[%c0_4, %c0_5] : memref<128x128xf32, #tpu.memory_space<vmem>>, vector<128x128xf32>
    tpu.vector_store %arg2[%c0_4, %c0_5], %6 {strides = array<i32>} : memref<128x128xf32, #tpu.memory_space<vmem>>, vector<128x128xf32>,
    %c0_i32_6 = arith.constant 0 : i32
    %8 = arith.cmpi eq, %arg0, %c0_i32_6 : i32
    %9 = arith.extui %8 : i1 to i32
    %c0_i32_7 = arith.constant 0 : i32
    %10 = arith.cmpi ne, %9, %c0_i32_7 : i32
    scf.if %10 {
      %c0_8 = arith.constant 0 : index
      %c0_9 = arith.constant 0 : index
      %11 = vector.load %arg2[%c0_8, %c0_9] : memref<128x128xf32, #tpu.memory_space<vmem>>, vector<128x128xf32>
      %12 = tpu.iota {dimensions = array<i32: 0>} : vector<128x128xi32>
      %13 = tpu.iota {dimensions = array<i32: 1>} : vector<128x128xi32>
      %14 = arith.cmpi eq, %12, %13 : vector<128x128xi32>
      %cst_10 = arith.constant 0.000000e+00 : f32
      %15 = vector.broadcast %cst_10 : f32 to vector<128x128xf32>
      %16 = arith.select %14, %11, %15 : vector<128x128xi1>, vector<128x128xf32>
      %cst_11 = arith.constant dense<0.000000e+00> : vector<128xf32>
      %17 = vector.multi_reduction <add>, %16, %cst_11 [1] : vector<128x128xf32> to vector<128xf32>
      %18 = vector.shape_cast %17 : vector<128xf32> to vector<128x1xf32>
      %cst_12 = arith.constant dense<0.000000e+00> : vector<128xf32>
      %19 = vector.multi_reduction <add>, %16, %cst_12 [0] : vector<128x128xf32> to vector<128xf32>
      %20 = vector.shape_cast %19 : vector<128xf32> to vector<1x128xf32>
      %21 = vector.broadcast %18 : vector<128x1xf32> to vector<128x128xf32>
      %22 = vector.broadcast %20 : vector<1x128xf32> to vector<128x128xf32>
      %23 = arith.addf %21, %22 : vector<128x128xf32>
      %cst_13 = arith.constant 2.000000e+00 : f32
      %24 = vector.broadcast %cst_13 : f32 to vector<128x128xf32>
      %25 = arith.mulf %24, %11 : vector<128x128xf32>
      %26 = arith.subf %23, %25 : vector<128x128xf32>
      %c0_14 = arith.constant 0 : index
      %c0_15 = arith.constant 0 : index
      %27 = vector.load %arg2[%c0_14, %c0_15] : memref<128x128xf32, #tpu.memory_space<vmem>>, vector<128x128xf32>
      tpu.vector_store %arg2[%c0_14, %c0_15], %26 {strides = array<i32>} : memref<128x128xf32, #tpu.memory_space<vmem>>, vector<128x128xf32>,
    } else {
    }
    return
  }
  func.func @transform_0(%arg0: i32) -> (i32, i32) {
    %c0_i32 = arith.constant 0 : i32
    %c0_i32_0 = arith.constant 0 : i32
    return %c0_i32, %arg0 : i32, i32
  }
  func.func @transform_1(%arg0: i32) -> (i32, i32) {
    %c0_i32 = arith.constant 0 : i32
    %c0_i32_0 = arith.constant 0 : i32
    %c0_i32_1 = arith.constant 0 : i32
    return %c0_i32, %c0_i32_0 : i32, i32
  }
}

</mosaic_0001>

<llo_original>
// kernel: tpu_custom_call.1
$region0: #{tpu_custom_call.1}
  #allocation0 [shape = 'u32[]', space=smem, size = 0x4, offset = 0x4, fixed_abs, tag = 'smem constant byte address 0x4 - core index']
  #allocation1 [shape = 'u32[144,128]{1,0:T(1,128)}', space=vmem, size = 0x12000, scoped, tag = 'internal scratch']
  %s0 = inlined_call_operand.hbm [shape: f32[128,128], index: 0, kind: input, shape index: {}]
  %s1 = inlined_call_operand.hbm [shape: f32[128,128], index: 1, kind: output, shape index: {}]
  %s2 = sld [smem:[#allocation0]]
  $region26: #{tpu_custom_call.1} parent=0
    _
  %s4 = ssub.s32 1, %s2
  %s5 = scalar_select 0, %s4, %s2
  $region1: #{tpu_custom_call.1} parent=0
    #allocation2 [shape = 'u8[65536]{0}', space=vmem, size = 0x10000, scoped, tag = 'input window, operand 0, single buffered']
    #allocation3 [shape = 's32[1]{0}', space=sflag, size = 0x4, scoped, tag = 'scoped memory for tpu_custom_call.1']
    #allocation4 [shape = 's32[1]{0}', space=sflag, size = 0x4, scoped, tag = 'scoped memory for tpu_custom_call.1']
    #allocation5 [shape = 'u8[65536]{0}', space=vmem, size = 0x10000, scoped, tag = 'output window, operand 0, single buffered']
    %6 = vsyncpa [#allocation3], 0
    %7 = vsyncpa [#allocation4], 0
    // Predicated region
    $region2: #{tpu_custom_call.1} parent=1 // pred_check
      _
    $region3: #{tpu_custom_call.1} parent=1 // pred_check_branch
      %9 = sbr.rel (0) target = $region5
    $region4: #{tpu_custom_call.1} parent=1 // pred_region
      %s11 = ssub.s32 2048, 2048
      %12 = vsyncadd [#allocation3], %s11
      %s13 = sshll.u32 [#allocation2], 4
      %s14 = int_to_ptr.vmem [resolvable:$true] %s13
      %19 = dma.hbm_to_vmem [thread:$0]  %s0, 2048, %s14, [#allocation3], 128, 128, 8
    $region5: #{tpu_custom_call.1} parent=1 // pred_fallthru
      _
    // Predicated region
    $region6: #{tpu_custom_call.1} parent=1 // pred_check
      _
    $region7: #{tpu_custom_call.1} parent=1 // pred_check_branch
      %21 = sbr.rel (0) target = $region9
    $region8: #{tpu_custom_call.1} parent=1 // pred_region
      %22 = dma.done [#allocation3], 2048
    $region9: #{tpu_custom_call.1} parent=1 // pred_fallthru
      _
    %p23 = scmp.eq.s32.totalorder 0, 0
    // Predicated region
    $region10: #{tpu_custom_call.1} parent=1 // pred_check
      %p24 = pneg %p23
    $region11: #{tpu_custom_call.1} parent=1 // pred_check_branch
      %26 = sbr.rel (%p24) target = $region13
    $region12: #{tpu_custom_call.1} parent=1 // pred_region
      %27 = vst [vmem:[#allocation5] sm:$0xff] 0.0
      %28 = vst [vmem:[#allocation5 + $0x8] sm:$0xff] 0.0
      %29 = vst [vmem:[#allocation5 + $0x10] sm:$0xff] 0.0
      %30 = vst [vmem:[#allocation5 + $0x18] sm:$0xff] 0.0
      %31 = vst [vmem:[#allocation5 + $0x20] sm:$0xff] 0.0
      %32 = vst [vmem:[#allocation5 + $0x28] sm:$0xff] 0.0
      %33 = vst [vmem:[#allocation5 + $0x30] sm:$0xff] 0.0
      %34 = vst [vmem:[#allocation5 + $0x38] sm:$0xff] 0.0
      %35 = vst [vmem:[#allocation5 + $0x40] sm:$0xff] 0.0
      %36 = vst [vmem:[#allocation5 + $0x48] sm:$0xff] 0.0
      %37 = vst [vmem:[#allocation5 + $0x50] sm:$0xff] 0.0
      %38 = vst [vmem:[#allocation5 + $0x58] sm:$0xff] 0.0
      %39 = vst [vmem:[#allocation5 + $0x60] sm:$0xff] 0.0
      %40 = vst [vmem:[#allocation5 + $0x68] sm:$0xff] 0.0
      %41 = vst [vmem:[#allocation5 + $0x70] sm:$0xff] 0.0
      %42 = vst [vmem:[#allocation5 + $0x78] sm:$0xff] 0.0
    $region13: #{tpu_custom_call.1} parent=1 // pred_fallthru
      _
    %v43 = vld [vmem:[#allocation2] sm:$0xff]
    %v44 = vld [vmem:[#allocation2 + $0x8] sm:$0xff]
    %v45 = vld [vmem:[#allocation2 + $0x10] sm:$0xff]
    %v46 = vld [vmem:[#allocation2 + $0x18] sm:$0xff]
    %v47 = vld [vmem:[#allocation2 + $0x20] sm:$0xff]
    %v48 = vld [vmem:[#allocation2 + $0x28] sm:$0xff]
    %v49 = vld [vmem:[#allocation2 + $0x30] sm:$0xff]
    %v50 = vld [vmem:[#allocation2 + $0x38] sm:$0xff]
    %v51 = vld [vmem:[#allocation2 + $0x40] sm:$0xff]
    %v52 = vld [vmem:[#allocation2 + $0x48] sm:$0xff]
    %v53 = vld [vmem:[#allocation2 + $0x50] sm:$0xff]
    %v54 = vld [vmem:[#allocation2 + $0x58] sm:$0xff]
    %v55 = vld [vmem:[#allocation2 + $0x60] sm:$0xff]
    %v56 = vld [vmem:[#allocation2 + $0x68] sm:$0xff]
    %v57 = vld [vmem:[#allocation2 + $0x70] sm:$0xff]
    %v58 = vld [vmem:[#allocation2 + $0x78] sm:$0xff]
    %v59 = vld [vmem:[#allocation5] sm:$0xff]
    %v60 = vld [vmem:[#allocation5 + $0x8] sm:$0xff]
    %v61 = vld [vmem:[#allocation5 + $0x10] sm:$0xff]
    %v62 = vld [vmem:[#allocation5 + $0x18] sm:$0xff]
    %v63 = vld [vmem:[#allocation5 + $0x20] sm:$0xff]
    %v64 = vld [vmem:[#allocation5 + $0x28] sm:$0xff]
    %v65 = vld [vmem:[#allocation5 + $0x30] sm:$0xff]
    %v66 = vld [vmem:[#allocation5 + $0x38] sm:$0xff]
    %v67 = vld [vmem:[#allocation5 + $0x40] sm:$0xff]
    %v68 = vld [vmem:[#allocation5 + $0x48] sm:$0xff]
    %v69 = vld [vmem:[#allocation5 + $0x50] sm:$0xff]
    %v70 = vld [vmem:[#allocation5 + $0x58] sm:$0xff]
    %v71 = vld [vmem:[#allocation5 + $0x60] sm:$0xff]
    %v72 = vld [vmem:[#allocation5 + $0x68] sm:$0xff]
    %v73 = vld [vmem:[#allocation5 + $0x70] sm:$0xff]
    %v74 = vld [vmem:[#allocation5 + $0x78] sm:$0xff]
    %75 = vmatprep.subr.mxu0 0.0
    %76 = vmatpush1.xpose.msra.mxu0 %v43
    %77 = vmatprep.subr.mxu0 0.0
    %78 = vmatpush1.xpose.msra.mxu0 %v44
    %79 = vmatprep.subr.mxu0 0.0
    %80 = vmatpush1.xpose.msra.mxu0 %v45
    %81 = vmatprep.subr.mxu0 0.0
    %82 = vmatpush1.xpose.msra.mxu0 %v46
    %83 = vmatprep.subr.mxu0 0.0
    %84 = vmatpush1.xpose.msra.mxu0 %v47
    %85 = vmatprep.subr.mxu0 0.0
    %86 = vmatpush1.xpose.msra.mxu0 %v48
    %87 = vmatprep.subr.mxu0 0.0
    %88 = vmatpush1.xpose.msra.mxu0 %v49
    %89 = vmatprep.subr.mxu0 0.0
    %90 = vmatpush1.xpose.msra.mxu0 %v50
    %91 = vmatprep.subr.mxu0 0.0
    %92 = vmatpush1.xpose.msra.mxu0 %v51
    %93 = vmatprep.subr.mxu0 0.0
    %94 = vmatpush1.xpose.msra.mxu0 %v52
    %95 = vmatprep.subr.mxu0 0.0
    %96 = vmatpush1.xpose.msra.mxu0 %v53
    %97 = vmatprep.subr.mxu0 0.0
    %98 = vmatpush1.xpose.msra.mxu0 %v54
    %99 = vmatprep.subr.mxu0 0.0
    %100 = vmatpush1.xpose.msra.mxu0 %v55
    %101 = vmatprep.subr.mxu0 0.0
    %102 = vmatpush1.xpose.msra.mxu0 %v56
    %103 = vmatprep.subr.mxu0 0.0
    %104 = vmatpush1.xpose.msra.mxu0 %v57
    %105 = vmatprep.subr.mxu0 0.0
    %106 = vmatpush1.xpose.msra.mxu0 %v58
    %107 = vmatprep.subr.mxu0 0.0
    %108 = vmatpush1.xpose.msra.mxu0 0.0
    %109 = vmatprep.subr.mxu0 0.0
    %110 = vmatpush1.xpose.msra.mxu0 0.0
    %111 = vmatprep.subr.mxu0 0.0
    %112 = vmatpush1.xpose.msra.mxu0 0.0
    %113 = vmatprep.subr.mxu0 0.0
    %114 = vmatpush1.xpose.msra.mxu0 0.0
    %115 = vmatprep.subr.mxu0 0.0
    %116 = vmatpush1.xpose.msra.mxu0 0.0
    %117 = vmatprep.subr.mxu0 0.0
    %118 = vmatpush1.xpose.msra.mxu0 0.0
    %119 = vmatprep.subr.mxu0 0.0
    %120 = vmatpush1.xpose.msra.mxu0 0.0
    %121 = vmatprep.subr.mxu0 0.0
    %122 = vmatpush1.xpose.msra.mxu0 0.0
    %123 = vmatprep.subr.mxu0 0.0
    %124 = vmatpush1.xpose.msra.mxu0 0.0
    %125 = vmatprep.subr.mxu0 0.0
    %126 = vmatpush1.xpose.msra.mxu0 0.0
    %127 = vmatprep.subr.mxu0 0.0
    %128 = vmatpush1.xpose.msra.mxu0 0.0
    %129 = vmatprep.subr.mxu0 0.0
    %130 = vmatpush1.xpose.msra.mxu0 0.0
    %131 = vmatprep.subr.mxu0 0.0
    %132 = vmatpush1.xpose.msra.mxu0 0.0
    %133 = vmatprep.subr.mxu0 0.0
    %134 = vmatpush1.xpose.msra.mxu0 0.0
    %135 = vmatprep.subr.mxu0 0.0
    %136 = vmatpush1.xpose.msra.mxu0 0.0
    %137 = vmatprep.subr.mxu0 0.0
    %138 = vmatpush1.xpose.msra.mxu0 0.0
    %139 = vmatprep.mubr.f32.mxu0 0.0
    %140 = vmatmul.mubr.f32.gmra.mrb[0].mxu0 %v43
    %v141 = vpop.f32.mrb[0].mxu0
    %v142 = vadd.f32 0.0, %v141
    %v143 = vpop.f32.mrb[0].mxu0
    %144 = vmatprep.mubr.f32.mxu0 0.0
    %145 = vmatmul.mubr.f32.gmra.mrb[0].mxu0 %v44
    %v146 = vpop.f32.mrb[0].mxu0
    %v147 = vadd.f32 0.0, %v146
    %v148 = vpop.f32.mrb[0].mxu0
    %149 = vmatprep.mubr.f32.mxu0 0.0
    %150 = vmatmul.mubr.f32.gmra.mrb[0].mxu0 %v45
    %v151 = vpop.f32.mrb[0].mxu0
    %v152 = vadd.f32 0.0, %v151
    %v153 = vpop.f32.mrb[0].mxu0
    %154 = vmatprep.mubr.f32.mxu0 0.0
    %155 = vmatmul.mubr.f32.gmra.mrb[0].mxu0 %v46
    %v156 = vpop.f32.mrb[0].mxu0
    %v157 = vadd.f32 0.0, %v156
    %v158 = vpop.f32.mrb[0].mxu0
    %159 = vmatprep.mubr.f32.mxu0 0.0
    %160 = vmatmul.mubr.f32.gmra.mrb[0].mxu0 %v47
    %v161 = vpop.f32.mrb[0].mxu0
    %v162 = vadd.f32 0.0, %v161
    %v163 = vpop.f32.mrb[0].mxu0
    %164 = vmatprep.mubr.f32.mxu0 0.0
    %165 = vmatmul.mubr.f32.gmra.mrb[0].mxu0 %v48
    %v166 = vpop.f32.mrb[0].mxu0
    %v167 = vadd.f32 0.0, %v166
    %v168 = vpop.f32.mrb[0].mxu0
    %169 = vmatprep.mubr.f32.mxu0 0.0
    %170 = vmatmul.mubr.f32.gmra.mrb[0].mxu0 %v49
    %v171 = vpop.f32.mrb[0].mxu0
    %v172 = vadd.f32 0.0, %v171
    %v173 = vpop.f32.mrb[0].mxu0
    %174 = vmatprep.mubr.f32.mxu0 0.0
    %175 = vmatmul.mubr.f32.gmra.mrb[0].mxu0 %v50
    %v176 = vpop.f32.mrb[0].mxu0
    %v177 = vadd.f32 0.0, %v176
    %v178 = vpop.f32.mrb[0].mxu0
    %179 = vmatprep.mubr.f32.mxu0 0.0
    %180 = vmatmul.mubr.f32.gmra.mrb[0].mxu0 %v51
    %v181 = vpop.f32.mrb[0].mxu0
    %v182 = vadd.f32 0.0, %v181
    %v183 = vpop.f32.mrb[0].mxu0
    %184 = vmatprep.mubr.f32.mxu0 0.0
    %185 = vmatmul.mubr.f32.gmra.mrb[0].mxu0 %v52
    %v186 = vpop.f32.mrb[0].mxu0
    %v187 = vadd.f32 0.0, %v186
    %v188 = vpop.f32.mrb[0].mxu0
    %189 = vmatprep.mubr.f32.mxu0 0.0
    %190 = vmatmul.mubr.f32.gmra.mrb[0].mxu0 %v53
    %v191 = vpop.f32.mrb[0].mxu0
    %v192 = vadd.f32 0.0, %v191
    %v193 = vpop.f32.mrb[0].mxu0
    %194 = vmatprep.mubr.f32.mxu0 0.0
    %195 = vmatmul.mubr.f32.gmra.mrb[0].mxu0 %v54
    %v196 = vpop.f32.mrb[0].mxu0
    %v197 = vadd.f32 0.0, %v196
    %v198 = vpop.f32.mrb[0].mxu0
    %199 = vmatprep.mubr.f32.mxu0 0.0
    %200 = vmatmul.mubr.f32.gmra.mrb[0].mxu0 %v55
    %v201 = vpop.f32.mrb[0].mxu0
    %v202 = vadd.f32 0.0, %v201
    %v203 = vpop.f32.mrb[0].mxu0
    %204 = vmatprep.mubr.f32.mxu0 0.0
    %205 = vmatmul.mubr.f32.gmra.mrb[0].mxu0 %v56
    %v206 = vpop.f32.mrb[0].mxu0
    %v207 = vadd.f32 0.0, %v206
    %v208 = vpop.f32.mrb[0].mxu0
    %209 = vmatprep.mubr.f32.mxu0 0.0
    %210 = vmatmul.mubr.f32.gmra.mrb[0].mxu0 %v57
    %v211 = vpop.f32.mrb[0].mxu0
    %v212 = vadd.f32 0.0, %v211
    %v213 = vpop.f32.mrb[0].mxu0
    %214 = vmatprep.mubr.f32.mxu0 0.0
    %215 = vmatmul.mubr.f32.gmra.mrb[0].mxu0 %v58
    %v216 = vpop.f32.mrb[0].mxu0
    %v217 = vadd.f32 0.0, %v216
    %v218 = vpop.f32.mrb[0].mxu0
    %219 = vdwg.mxu0
    %v220 = vadd.f32 %v59, %v142
    %v221 = vadd.f32 %v60, %v147
    %v222 = vadd.f32 %v61, %v152
    %v223 = vadd.f32 %v62, %v157
    %v224 = vadd.f32 %v63, %v162
    %v225 = vadd.f32 %v64, %v167
    %v226 = vadd.f32 %v65, %v172
    %v227 = vadd.f32 %v66, %v177
    %v228 = vadd.f32 %v67, %v182
    %v229 = vadd.f32 %v68, %v187
    %v230 = vadd.f32 %v69, %v192
    %v231 = vadd.f32 %v70, %v197
    %v232 = vadd.f32 %v71, %v202
    %v233 = vadd.f32 %v72, %v207
    %v234 = vadd.f32 %v73, %v212
    %v235 = vadd.f32 %v74, %v217
    %236 = vst [vmem:[#allocation5] sm:$0xff] %v220
    %237 = vst [vmem:[#allocation5 + $0x8] sm:$0xff] %v221
    %238 = vst [vmem:[#allocation5 + $0x10] sm:$0xff] %v222
    %239 = vst [vmem:[#allocation5 + $0x18] sm:$0xff] %v223
    %240 = vst [vmem:[#allocation5 + $0x20] sm:$0xff] %v224
    %241 = vst [vmem:[#allocation5 + $0x28] sm:$0xff] %v225
    %242 = vst [vmem:[#allocation5 + $0x30] sm:$0xff] %v226
    %243 = vst [vmem:[#allocation5 + $0x38] sm:$0xff] %v227
    %244 = vst [vmem:[#allocation5 + $0x40] sm:$0xff] %v228
    %245 = vst [vmem:[#allocation5 + $0x48] sm:$0xff] %v229
    %246 = vst [vmem:[#allocation5 + $0x50] sm:$0xff] %v230
    %247 = vst [vmem:[#allocation5 + $0x58] sm:$0xff] %v231
    %248 = vst [vmem:[#allocation5 + $0x60] sm:$0xff] %v232
    %249 = vst [vmem:[#allocation5 + $0x68] sm:$0xff] %v233
    %250 = vst [vmem:[#allocation5 + $0x70] sm:$0xff] %v234
    %251 = vst [vmem:[#allocation5 + $0x78] sm:$0xff] %v235
    // Predicated region
    $region14: #{tpu_custom_call.1} parent=1 // pred_check
      %p252 = pneg %p23
    $region15: #{tpu_custom_call.1} parent=1 // pred_check_branch
      %254 = sbr.rel (%p252) target = $region17
    $region16: #{tpu_custom_call.1} parent=1 // pred_region
      %v255 = vld [vmem:[#allocation5] sm:$0xff]
      %v256 = vld [vmem:[#allocation5 + $0x8] sm:$0xff]
      %v257 = vld [vmem:[#allocation5 + $0x10] sm:$0xff]
      %v258 = vld [vmem:[#allocation5 + $0x18] sm:$0xff]
      %v259 = vld [vmem:[#allocation5 + $0x20] sm:$0xff]
      %v260 = vld [vmem:[#allocation5 + $0x28] sm:$0xff]
      %v261 = vld [vmem:[#allocation5 + $0x30] sm:$0xff]
      %v262 = vld [vmem:[#allocation5 + $0x38] sm:$0xff]
      %v263 = vld [vmem:[#allocation5 + $0x40] sm:$0xff]
      %v264 = vld [vmem:[#allocation5 + $0x48] sm:$0xff]
      %v265 = vld [vmem:[#allocation5 + $0x50] sm:$0xff]
      %v266 = vld [vmem:[#allocation5 + $0x58] sm:$0xff]
      %v267 = vld [vmem:[#allocation5 + $0x60] sm:$0xff]
      %v268 = vld [vmem:[#allocation5 + $0x68] sm:$0xff]
      %v269 = vld [vmem:[#allocation5 + $0x70] sm:$0xff]
      %v270 = vld [vmem:[#allocation5 + $0x78] sm:$0xff]
      %v271 = vlaneseq
      %v272 = vshrl.u32 %v271, 7
      %v273 = vadd.s32 %v272, 8
      %v274 = vadd.s32 %v272, 16
      %v275 = vadd.s32 %v272, 24
      %v276 = vadd.s32 %v272, 32
      %v277 = vadd.s32 %v272, 40
      %v278 = vadd.s32 %v272, 48
      %v279 = vadd.s32 %v272, 56
      %v280 = vadd.s32 %v272, 64
      %v281 = vadd.s32 %v272, 72
      %v282 = vadd.s32 %v272, 80
      %v283 = vadd.s32 %v272, 88
      %v284 = vadd.s32 %v272, 96
      %v285 = vadd.s32 %v272, 104
      %v286 = vadd.s32 %v272, 112
      %v287 = vadd.s32 %v272, 120
      %v288 = vlaneseq
      %v289 = vand.u32 %v288, 127
      %vm290 = vcmp.eq.s32.totalorder %v272, %v289
      %vm291 = vcmp.eq.s32.totalorder %v273, %v289
      %vm292 = vcmp.eq.s32.totalorder %v274, %v289
      %vm293 = vcmp.eq.s32.totalorder %v275, %v289
      %vm294 = vcmp.eq.s32.totalorder %v276, %v289
      %vm295 = vcmp.eq.s32.totalorder %v277, %v289
      %vm296 = vcmp.eq.s32.totalorder %v278, %v289
      %vm297 = vcmp.eq.s32.totalorder %v279, %v289
      %vm298 = vcmp.eq.s32.totalorder %v280, %v289
      %vm299 = vcmp.eq.s32.totalorder %v281, %v289
      %vm300 = vcmp.eq.s32.totalorder %v282, %v289
      %vm301 = vcmp.eq.s32.totalorder %v283, %v289
      %vm302 = vcmp.eq.s32.totalorder %v284, %v289
      %vm303 = vcmp.eq.s32.totalorder %v285, %v289
      %vm304 = vcmp.eq.s32.totalorder %v286, %v289
      %vm305 = vcmp.eq.s32.totalorder %v287, %v289
      %v306 = vsel %vm290, %v255, 0.0
      %v307 = vsel %vm291, %v256, 0.0
      %v308 = vsel %vm292, %v257, 0.0
      %v309 = vsel %vm293, %v258, 0.0
      %v310 = vsel %vm294, %v259, 0.0
      %v311 = vsel %vm295, %v260, 0.0
      %v312 = vsel %vm296, %v261, 0.0
      %v313 = vsel %vm297, %v262, 0.0
      %v314 = vsel %vm298, %v263, 0.0
      %v315 = vsel %vm299, %v264, 0.0
      %v316 = vsel %vm300, %v265, 0.0
      %v317 = vsel %vm301, %v266, 0.0
      %v318 = vsel %vm302, %v267, 0.0
      %v319 = vsel %vm303, %v268, 0.0
      %v320 = vsel %vm304, %v269, 0.0
      %v321 = vsel %vm305, %v270, 0.0
      %322 = vadd.xlane.f32.xlu0 %v306
      %v323 = vpop.xlane.xlu0 %322
      %324 = vadd.xlane.f32.xlu0 %v307
      %v325 = vpop.xlane.xlu0 %324
      %326 = vadd.xlane.f32.xlu0 %v308
      %v327 = vpop.xlane.xlu0 %326
      %328 = vadd.xlane.f32.xlu0 %v309
      %v329 = vpop.xlane.xlu0 %328
      %330 = vadd.xlane.f32.xlu0 %v310
      %v331 = vpop.xlane.xlu0 %330
      %332 = vadd.xlane.f32.xlu0 %v311
      %v333 = vpop.xlane.xlu0 %332
      %334 = vadd.xlane.f32.xlu0 %v312
      %v335 = vpop.xlane.xlu0 %334
      %336 = vadd.xlane.f32.xlu0 %v313
      %v337 = vpop.xlane.xlu0 %336
      %338 = vadd.xlane.f32.xlu0 %v314
      %v339 = vpop.xlane.xlu0 %338
      %340 = vadd.xlane.f32.xlu0 %v315
      %v341 = vpop.xlane.xlu0 %340
      %342 = vadd.xlane.f32.xlu0 %v316
      %v343 = vpop.xlane.xlu0 %342
      %344 = vadd.xlane.f32.xlu0 %v317
      %v345 = vpop.xlane.xlu0 %344
      %346 = vadd.xlane.f32.xlu0 %v318
      %v347 = vpop.xlane.xlu0 %346
      %348 = vadd.xlane.f32.xlu0 %v319
      %v349 = vpop.xlane.xlu0 %348
      %350 = vadd.xlane.f32.xlu0 %v320
      %v351 = vpop.xlane.xlu0 %350
      %352 = vadd.xlane.f32.xlu0 %v321
      %v353 = vpop.xlane.xlu0 %352
      %v354 = vadd.f32 %v306, %v307
      %v355 = vadd.f32 %v354, %v308
      %v356 = vadd.f32 %v355, %v309
      %v357 = vadd.f32 %v356, %v310
      %v358 = vadd.f32 %v357, %v311
      %v359 = vadd.f32 %v358, %v312
      %v360 = vadd.f32 %v359, %v313
      %v361 = vadd.f32 %v360, %v314
      %v362 = vadd.f32 %v361, %v315
      %v363 = vadd.f32 %v362, %v316
      %v364 = vadd.f32 %v363, %v317
      %v365 = vadd.f32 %v364, %v318
      %v366 = vadd.f32 %v365, %v319
      %v367 = vadd.f32 %v366, %v320
      %v368 = vadd.f32 %v367, %v321
      %v369 = vrot.slane %v368, 4
      %v370 = vadd.f32 %v368, %v369
      %v371 = vrot.slane %v370, 2
      %v372 = vadd.f32 %v370, %v371
      %v373 = vrot.slane %v372, 1
      %v374 = vadd.f32 %v372, %v373
      %v375 = vadd.f32 %v323, %v374
      %v376 = vadd.f32 %v325, %v374
      %v377 = vadd.f32 %v327, %v374
      %v378 = vadd.f32 %v329, %v374
      %v379 = vadd.f32 %v331, %v374
      %v380 = vadd.f32 %v333, %v374
      %v381 = vadd.f32 %v335, %v374
      %v382 = vadd.f32 %v337, %v374
      %v383 = vadd.f32 %v339, %v374
      %v384 = vadd.f32 %v341, %v374
      %v385 = vadd.f32 %v343, %v374
      %v386 = vadd.f32 %v345, %v374
      %v387 = vadd.f32 %v347, %v374
      %v388 = vadd.f32 %v349, %v374
      %v389 = vadd.f32 %v351, %v374
      %v390 = vadd.f32 %v353, %v374
      %v391 = vmul.f32 %v255, 2.0
      %v392 = vmul.f32 %v256, 2.0
      %v393 = vmul.f32 %v257, 2.0
      %v394 = vmul.f32 %v258, 2.0
      %v395 = vmul.f32 %v259, 2.0
      %v396 = vmul.f32 %v260, 2.0
      %v397 = vmul.f32 %v261, 2.0
      %v398 = vmul.f32 %v262, 2.0
      %v399 = vmul.f32 %v263, 2.0
      %v400 = vmul.f32 %v264, 2.0
      %v401 = vmul.f32 %v265, 2.0
      %v402 = vmul.f32 %v266, 2.0
      %v403 = vmul.f32 %v267, 2.0
      %v404 = vmul.f32 %v268, 2.0
      %v405 = vmul.f32 %v269, 2.0
      %v406 = vmul.f32 %v270, 2.0
      %v407 = vsub.f32 %v375, %v391
      %v408 = vsub.f32 %v376, %v392
      %v409 = vsub.f32 %v377, %v393
      %v410 = vsub.f32 %v378, %v394
      %v411 = vsub.f32 %v379, %v395
      %v412 = vsub.f32 %v380, %v396
      %v413 = vsub.f32 %v381, %v397
      %v414 = vsub.f32 %v382, %v398
      %v415 = vsub.f32 %v383, %v399
      %v416 = vsub.f32 %v384, %v400
      %v417 = vsub.f32 %v385, %v401
      %v418 = vsub.f32 %v386, %v402
      %v419 = vsub.f32 %v387, %v403
      %v420 = vsub.f32 %v388, %v404
      %v421 = vsub.f32 %v389, %v405
      %v422 = vsub.f32 %v390, %v406
      %423 = vst [vmem:[#allocation5] sm:$0xff] %v407
      %424 = vst [vmem:[#allocation5 + $0x8] sm:$0xff] %v408
      %425 = vst [vmem:[#allocation5 + $0x10] sm:$0xff] %v409
      %426 = vst [vmem:[#allocation5 + $0x18] sm:$0xff] %v410
      %427 = vst [vmem:[#allocation5 + $0x20] sm:$0xff] %v411
      %428 = vst [vmem:[#allocation5 + $0x28] sm:$0xff] %v412
      %429 = vst [vmem:[#allocation5 + $0x30] sm:$0xff] %v413
      %430 = vst [vmem:[#allocation5 + $0x38] sm:$0xff] %v414
      %431 = vst [vmem:[#allocation5 + $0x40] sm:$0xff] %v415
      %432 = vst [vmem:[#allocation5 + $0x48] sm:$0xff] %v416
      %433 = vst [vmem:[#allocation5 + $0x50] sm:$0xff] %v417
      %434 = vst [vmem:[#allocation5 + $0x58] sm:$0xff] %v418
      %435 = vst [vmem:[#allocation5 + $0x60] sm:$0xff] %v419
      %436 = vst [vmem:[#allocation5 + $0x68] sm:$0xff] %v420
      %437 = vst [vmem:[#allocation5 + $0x70] sm:$0xff] %v421
      %438 = vst [vmem:[#allocation5 + $0x78] sm:$0xff] %v422
    $region17: #{tpu_custom_call.1} parent=1 // pred_fallthru
      _
    // Predicated region
    $region18: #{tpu_custom_call.1} parent=1 // pred_check
      _
    $region19: #{tpu_custom_call.1} parent=1 // pred_check_branch
      %440 = sbr.rel (0) target = $region21
    $region20: #{tpu_custom_call.1} parent=1 // pred_region
      %s442 = ssub.s32 2048, 2048
      %443 = vsyncadd [#allocation4], %s442
      %s444 = sshll.u32 [#allocation5], 4
      %s445 = int_to_ptr.vmem [resolvable:$true] %s444
      %450 = dma.vmem_to_hbm [thread:$0]  %s445, 2048, %s1, [#allocation4], 128, 128, 8
    $region21: #{tpu_custom_call.1} parent=1 // pred_fallthru
      _
    // Predicated region
    $region22: #{tpu_custom_call.1} parent=1 // pred_check
      _
    $region23: #{tpu_custom_call.1} parent=1 // pred_check_branch
      %452 = sbr.rel (0) target = $region25
    $region24: #{tpu_custom_call.1} parent=1 // pred_region
      %453 = dma.done [#allocation4], 2048
    $region25: #{tpu_custom_call.1} parent=1 // pred_fallthru
      _
    %454 = vsyncpa [#allocation3], 1
    %455 = vsyncpa [#allocation4], 1

</llo_original>
